<compile_context>
chip_gen: v6e
topology: v6e:2x2x1
jax: 0.10.0
libtpu: 0.0.40
codegen_flags: <defaults>
</compile_context>

<pallas_src>
import numpy as np
import jax
import jax.numpy as jnp
from jax.experimental import pallas as pl
from jax.experimental.pallas import tpu as pltpu

# -------------------- model dims --------------------
DIM_X = 3
DIM_Y = 1
DIM_HID = 128
DIM_IN = DIM_X + DIM_Y + 1      # yenc=True, wenc=True -> 5
DIM_IN_PAD = 8                  # pad concat features to one sublane tile (not 128)
W_LANE = DIM_X + DIM_Y          # lane index of the bootstrap weight inside the concat
B = 2                           # batch
N = 8                           # number of context points (set dimension)


# -------------------- Pallas kernel --------------------
def _make_kernel(b, n):
    bn = b * n
    inv_n = 1.0 / n

    def kernel(x_ref, smalls_ref, wstack_ref, o_ref):
        # x_ref      : [b*n, DIM_IN_PAD] f32  concat([xc, yc, w]) zero-padded to 8 lanes
        # smalls_ref : [16, DIM_HID]     f32  rows 0..4  = W1 (5x128), rows 5..7 zero,
        #                                     rows 8..13 = b1,b2,b3,b4,bp1,bp2, 14..15 zero
        # wstack_ref : [5, DIM_HID, DIM_HID] bf16  (W2, W3, W4, Wp1, Wp2)
        # o_ref      : [b, DIM_HID] f32
        x = x_ref[...]                           # [bn, 8]
        smalls = smalls_ref[...]                 # [16, 128]

        def bias(j):
            r = DIM_IN_PAD + j
            return smalls[r:r + 1, :]            # [1, 128]

        # ---- net_pre layer 1: 5 broadcast MACs on the VPU (K=5 is too small for MXU) ----
        h = bias(0) + x[:, 0:1] * smalls[0:1, :]
        for i in range(1, DIM_IN):
            h = h + x[:, i:i + 1] * smalls[i:i + 1, :]
        h = jnp.maximum(h, 0.0)                  # [bn, 128] f32

        def dense(v, k, j, relu):
            # bf16 MXU inputs, f32 accumulation; bias add / ReLU stay in f32 on the VPU.
            y = jnp.dot(v.astype(jnp.bfloat16), wstack_ref[k],
                        preferred_element_type=jnp.float32) + bias(j)
            return jnp.maximum(y, 0.0) if relu else y

        # ---- net_pre layers 2..4 (no ReLU on the last pre layer) ----
        h = dense(h, 0, 1, True)
        h = dense(h, 1, 2, True)
        h = dense(h, 2, 3, False)                # [bn, 128]

        # ---- wagg == 'mean': (h * w).mean(axis=-2); 1/n folded into the weight ----
        wv = x[:, W_LANE:W_LANE + 1] * inv_n     # [bn, 1] (bootstrap weight is lane 4)
        agg = jnp.sum((h * wv).reshape(b, n, DIM_HID), axis=1)   # [b, 128]

        # ---- net_post: Linear->ReLU, Linear ----
        p = dense(agg, 3, 4, True)
        p = dense(p, 4, 5, False)                # [b, 128]
        o_ref[...] = p.astype(o_ref.dtype)

    return kernel


def neuboots_encoder_pallas(xc, yc, w, params):
    """xc: [B, N, DIM_X], yc: [B, N, DIM_Y], w: [B, N, 1] -> [B, DIM_HID]"""
    b, n, _ = xc.shape
    (w1, b1, w2, b2, w3, b3, w4, b4, wp1, bp1, wp2, bp2) = params

    # concat + pad features 5 -> 8 lanes only; flatten (batch, set) into rows
    cat = jnp.concatenate([xc, yc, w], axis=-1)                       # [B, N, 5]
    cat = jnp.pad(cat, ((0, 0), (0, 0), (0, DIM_IN_PAD - DIM_IN)))    # [B, N, 8]
    x2d = cat.reshape(b * n, DIM_IN_PAD).astype(jnp.float32)          # [B*N, 8]

    # pack W1 (padded to 8 rows) + the six biases (+2 zero rows) into one [16,128] array
    w1p = jnp.pad(w1, ((0, DIM_IN_PAD - DIM_IN), (0, 0)))             # [8, 128]
    b_stack = jnp.concatenate(
        [b1, b2, b3, b4, bp1, bp2, jnp.zeros((2, DIM_HID), jnp.float32)], axis=0)
    smalls = jnp.concatenate([w1p, b_stack], axis=0)                  # [16, 128] f32

    # stack the five 128x128 matrices; store bf16 (f32 accumulation inside the kernel)
    w_stack = jnp.stack([w2, w3, w4, wp1, wp2]).astype(jnp.bfloat16)  # [5, 128, 128]

    kernel = _make_kernel(b, n)

    return pl.pallas_call(
        kernel,
        out_shape=jax.ShapeDtypeStruct((b, DIM_HID), jnp.float32),
        grid_spec=pltpu.PrefetchScalarGridSpec(
            num_scalar_prefetch=0,
            grid=(1,),  # single step: whole batch fused, 3 input DMAs, 1 output store
            in_specs=[
                pl.BlockSpec((b * n, DIM_IN_PAD), lambda i: (0, 0)),
                pl.BlockSpec(smalls.shape, lambda i: (0, 0)),
                pl.BlockSpec((5, DIM_HID, DIM_HID), lambda i: (0, 0, 0)),
            ],
            out_specs=pl.BlockSpec((b, DIM_HID), lambda i: (0, 0)),
        ),
        compiler_params=pltpu.CompilerParams(
            dimension_semantics=("arbitrary",)),
    )(x2d, smalls, w_stack)


# -------------------- deterministic parameter init --------------------
def init_params(key):
    def linear(key, din, dout):
        k1, k2 = jax.random.split(key)
        bound = 1.0 / np.sqrt(din)
        W = jax.random.uniform(k1, (din, dout), jnp.float32, -bound, bound)
        bvec = jax.random.uniform(k2, (1, dout), jnp.float32, -bound, bound)
        return W, bvec

    keys = jax.random.split(key, 6)
    w1, b1 = linear(keys[0], DIM_IN, DIM_HID)      # net_pre layer 1
    w2, b2 = linear(keys[1], DIM_HID, DIM_HID)     # net_pre layer 2
    w3, b3 = linear(keys[2], DIM_HID, DIM_HID)     # net_pre layer 3
    w4, b4 = linear(keys[3], DIM_HID, DIM_HID)     # net_pre layer 4 (no ReLU)
    wp1, bp1 = linear(keys[4], DIM_HID, DIM_HID)   # net_post layer 1
    wp2, bp2 = linear(keys[5], DIM_HID, DIM_HID)   # net_post layer 2 (output)
    return (w1, b1, w2, b2, w3, b3, w4, b4, wp1, bp1, wp2, bp2)


# -------------------- pure-JAX f32 reference (true module semantics) --------------------
def neuboots_encoder_ref(xc, yc, w, params):
    (w1, b1, w2, b2, w3, b3, w4, b4, wp1, bp1, wp2, bp2) = params
    x = jnp.concatenate([xc, yc, w], axis=-1)
    h = jax.nn.relu(x @ w1 + b1)
    h = jax.nn.relu(h @ w2 + b2)
    h = jax.nn.relu(h @ w3 + b3)
    h = h @ w4 + b4
    agg = jnp.mean(h * w, axis=-2)
    p = jax.nn.relu(agg @ wp1 + bp1)
    return p @ wp2 + bp2


if __name__ == "__main__":
    key = jax.random.PRNGKey(0)
    kx, ky, kw, kp = jax.random.split(key, 4)

    xc = jax.random.normal(kx, (B, N, DIM_X), jnp.float32)
    yc = jax.random.normal(ky, (B, N, DIM_Y), jnp.float32)
    # bootstrap weights (positive, like multinomial bootstrap weights)
    w = jax.random.uniform(kw, (B, N, 1), jnp.float32, 0.0, 2.0)

    params = init_params(kp)

    out = neuboots_encoder_pallas(xc, yc, w, params)
    out = jax.block_until_ready(out)

    ref = neuboots_encoder_ref(xc, yc, w, params)
    # tolerance accounts for bf16 weight storage / bf16 MXU inputs (f32 accumulation)
    np.testing.assert_allclose(np.asarray(out), np.asarray(ref), rtol=2e-2, atol=2e-2)

    print("KERNEL_OK")
</pallas_src>

<mosaic_0001>
module attributes {stable_mosaic.version = 11 : i64} {
  func.func @kernel(%arg0: i32, %arg1: memref<16x8xf32, #tpu.memory_space<vmem>>, %arg2: memref<16x128xf32, #tpu.memory_space<vmem>>, %arg3: memref<5x128x128xbf16, #tpu.memory_space<vmem>>, %arg4: memref<2x128xf32, #tpu.memory_space<vmem>>) attributes {dimension_semantics = [#tpu.dimension_semantics<arbitrary>], iteration_bounds = array<i64: 1>, scalar_prefetch = 0 : i64, scratch_operands = 0 : i64, tpu.core_type = #tpu.core_type<tc>, window_params = [{pipeline_mode = #tpu.pipeline_mode<synchronous>, transform_indices = @transform_0, window_bounds = array<i64: 16, 8>}, {pipeline_mode = #tpu.pipeline_mode<synchronous>, transform_indices = @transform_1, window_bounds = array<i64: 16, 128>}, {pipeline_mode = #tpu.pipeline_mode<synchronous>, transform_indices = @transform_2, window_bounds = array<i64: 5, 128, 128>}, {pipeline_mode = #tpu.pipeline_mode<synchronous>, transform_indices = @transform_3, window_bounds = array<i64: 2, 128>}]} {
    %c0 = arith.constant 0 : index
    %c0_0 = arith.constant 0 : index
    %0 = vector.load %arg1[%c0, %c0_0] : memref<16x8xf32, #tpu.memory_space<vmem>>, vector<16x8xf32>
    %c0_1 = arith.constant 0 : index
    %c0_2 = arith.constant 0 : index
    %1 = vector.load %arg2[%c0_1, %c0_2] : memref<16x128xf32, #tpu.memory_space<vmem>>, vector<16x128xf32>
    %2 = vector.extract_strided_slice %1 {offsets = [8, 0], sizes = [1, 128], strides = [1, 1]} : vector<16x128xf32> to vector<1x128xf32>
    %3 = vector.extract_strided_slice %0 {offsets = [0, 0], sizes = [16, 1], strides = [1, 1]} : vector<16x8xf32> to vector<16x1xf32>
    %4 = vector.extract_strided_slice %1 {offsets = [0, 0], sizes = [1, 128], strides = [1, 1]} : vector<16x128xf32> to vector<1x128xf32>
    %5 = vector.broadcast %3 : vector<16x1xf32> to vector<16x128xf32>
    %6 = vector.broadcast %4 : vector<1x128xf32> to vector<16x128xf32>
    %7 = arith.mulf %5, %6 : vector<16x128xf32>
    %8 = vector.broadcast %2 : vector<1x128xf32> to vector<16x128xf32>
    %9 = arith.addf %8, %7 : vector<16x128xf32>
    %10 = vector.extract_strided_slice %0 {offsets = [0, 1], sizes = [16, 1], strides = [1, 1]} : vector<16x8xf32> to vector<16x1xf32>
    %11 = vector.extract_strided_slice %1 {offsets = [1, 0], sizes = [1, 128], strides = [1, 1]} : vector<16x128xf32> to vector<1x128xf32>
    %12 = vector.broadcast %10 : vector<16x1xf32> to vector<16x128xf32>
    %13 = vector.broadcast %11 : vector<1x128xf32> to vector<16x128xf32>
    %14 = arith.mulf %12, %13 : vector<16x128xf32>
    %15 = arith.addf %9, %14 : vector<16x128xf32>
    %16 = vector.extract_strided_slice %0 {offsets = [0, 2], sizes = [16, 1], strides = [1, 1]} : vector<16x8xf32> to vector<16x1xf32>
    %17 = vector.extract_strided_slice %1 {offsets = [2, 0], sizes = [1, 128], strides = [1, 1]} : vector<16x128xf32> to vector<1x128xf32>
    %18 = vector.broadcast %16 : vector<16x1xf32> to vector<16x128xf32>
    %19 = vector.broadcast %17 : vector<1x128xf32> to vector<16x128xf32>
    %20 = arith.mulf %18, %19 : vector<16x128xf32>
    %21 = arith.addf %15, %20 : vector<16x128xf32>
    %22 = vector.extract_strided_slice %0 {offsets = [0, 3], sizes = [16, 1], strides = [1, 1]} : vector<16x8xf32> to vector<16x1xf32>
    %23 = vector.extract_strided_slice %1 {offsets = [3, 0], sizes = [1, 128], strides = [1, 1]} : vector<16x128xf32> to vector<1x128xf32>
    %24 = vector.broadcast %22 : vector<16x1xf32> to vector<16x128xf32>
    %25 = vector.broadcast %23 : vector<1x128xf32> to vector<16x128xf32>
    %26 = arith.mulf %24, %25 : vector<16x128xf32>
    %27 = arith.addf %21, %26 : vector<16x128xf32>
    %28 = vector.extract_strided_slice %0 {offsets = [0, 4], sizes = [16, 1], strides = [1, 1]} : vector<16x8xf32> to vector<16x1xf32>
    %29 = vector.extract_strided_slice %1 {offsets = [4, 0], sizes = [1, 128], strides = [1, 1]} : vector<16x128xf32> to vector<1x128xf32>
    %30 = vector.broadcast %28 : vector<16x1xf32> to vector<16x128xf32>
    %31 = vector.broadcast %29 : vector<1x128xf32> to vector<16x128xf32>
    %32 = arith.mulf %30, %31 : vector<16x128xf32>
    %33 = arith.addf %27, %32 : vector<16x128xf32>
    %cst = arith.constant 0.000000e+00 : f32
    %34 = vector.broadcast %cst : f32 to vector<16x128xf32>
    %35 = arith.maximumf %33, %34 : vector<16x128xf32>
    %36 = arith.truncf %35 : vector<16x128xf32> to vector<16x128xbf16>
    %c0_3 = arith.constant 0 : index
    %c0_4 = arith.constant 0 : index
    %c0_5 = arith.constant 0 : index
    %37 = vector.load %arg3[%c0_3, %c0_4, %c0_5] : memref<5x128x128xbf16, #tpu.memory_space<vmem>>, vector<1x128x128xbf16>
    %38 = vector.shape_cast %37 : vector<1x128x128xbf16> to vector<128x128xbf16>
    %cst_6 = arith.constant dense<0.000000e+00> : vector<16x128xf32>
    %39 = tpu.matmul %36, %38, %cst_6 {dimension_numbers = #tpu.dot_dimension_numbers<[1], [0], [0], [1], [0, 0, 1, 1], [], []>} : vector<16x128xbf16>, vector<128x128xbf16>, vector<16x128xf32> -> vector<16x128xf32>
    %40 = vector.extract_strided_slice %1 {offsets = [9, 0], sizes = [1, 128], strides = [1, 1]} : vector<16x128xf32> to vector<1x128xf32>
    %41 = vector.broadcast %40 : vector<1x128xf32> to vector<16x128xf32>
    %42 = arith.addf %39, %41 : vector<16x128xf32>
    %cst_7 = arith.constant 0.000000e+00 : f32
    %43 = vector.broadcast %cst_7 : f32 to vector<16x128xf32>
    %44 = arith.maximumf %42, %43 : vector<16x128xf32>
    %45 = arith.truncf %44 : vector<16x128xf32> to vector<16x128xbf16>
    %c1 = arith.constant 1 : index
    %c0_8 = arith.constant 0 : index
    %c0_9 = arith.constant 0 : index
    %46 = vector.load %arg3[%c1, %c0_8, %c0_9] : memref<5x128x128xbf16, #tpu.memory_space<vmem>>, vector<1x128x128xbf16>
    %47 = vector.shape_cast %46 : vector<1x128x128xbf16> to vector<128x128xbf16>
    %cst_10 = arith.constant dense<0.000000e+00> : vector<16x128xf32>
    %48 = tpu.matmul %45, %47, %cst_10 {dimension_numbers = #tpu.dot_dimension_numbers<[1], [0], [0], [1], [0, 0, 1, 1], [], []>} : vector<16x128xbf16>, vector<128x128xbf16>, vector<16x128xf32> -> vector<16x128xf32>
    %49 = vector.extract_strided_slice %1 {offsets = [10, 0], sizes = [1, 128], strides = [1, 1]} : vector<16x128xf32> to vector<1x128xf32>
    %50 = vector.broadcast %49 : vector<1x128xf32> to vector<16x128xf32>
    %51 = arith.addf %48, %50 : vector<16x128xf32>
    %cst_11 = arith.constant 0.000000e+00 : f32
    %52 = vector.broadcast %cst_11 : f32 to vector<16x128xf32>
    %53 = arith.maximumf %51, %52 : vector<16x128xf32>
    %54 = arith.truncf %53 : vector<16x128xf32> to vector<16x128xbf16>
    %c2 = arith.constant 2 : index
    %c0_12 = arith.constant 0 : index
    %c0_13 = arith.constant 0 : index
    %55 = vector.load %arg3[%c2, %c0_12, %c0_13] : memref<5x128x128xbf16, #tpu.memory_space<vmem>>, vector<1x128x128xbf16>
    %56 = vector.shape_cast %55 : vector<1x128x128xbf16> to vector<128x128xbf16>
    %cst_14 = arith.constant dense<0.000000e+00> : vector<16x128xf32>
    %57 = tpu.matmul %54, %56, %cst_14 {dimension_numbers = #tpu.dot_dimension_numbers<[1], [0], [0], [1], [0, 0, 1, 1], [], []>} : vector<16x128xbf16>, vector<128x128xbf16>, vector<16x128xf32> -> vector<16x128xf32>
    %58 = vector.extract_strided_slice %1 {offsets = [11, 0], sizes = [1, 128], strides = [1, 1]} : vector<16x128xf32> to vector<1x128xf32>
    %59 = vector.broadcast %58 : vector<1x128xf32> to vector<16x128xf32>
    %60 = arith.addf %57, %59 : vector<16x128xf32>
    %61 = vector.extract_strided_slice %0 {offsets = [0, 4], sizes = [16, 1], strides = [1, 1]} : vector<16x8xf32> to vector<16x1xf32>
    %cst_15 = arith.constant 1.250000e-01 : f32
    %62 = vector.broadcast %cst_15 : f32 to vector<16x1xf32>
    %63 = arith.mulf %61, %62 : vector<16x1xf32>
    %64 = vector.broadcast %63 : vector<16x1xf32> to vector<16x128xf32>
    %65 = arith.mulf %60, %64 : vector<16x128xf32>
    %66 = vector.shape_cast %65 : vector<16x128xf32> to vector<2x8x128xf32>
    %cst_16 = arith.constant dense<0.000000e+00> : vector<2x128xf32>
    %67 = vector.multi_reduction <add>, %66, %cst_16 [1] : vector<2x8x128xf32> to vector<2x128xf32>
    %68 = arith.truncf %67 : vector<2x128xf32> to vector<2x128xbf16>
    %c3 = arith.constant 3 : index
    %c0_17 = arith.constant 0 : index
    %c0_18 = arith.constant 0 : index
    %69 = vector.load %arg3[%c3, %c0_17, %c0_18] : memref<5x128x128xbf16, #tpu.memory_space<vmem>>, vector<1x128x128xbf16>
    %70 = vector.shape_cast %69 : vector<1x128x128xbf16> to vector<128x128xbf16>
    %cst_19 = arith.constant dense<0.000000e+00> : vector<2x128xf32>
    %71 = tpu.matmul %68, %70, %cst_19 {dimension_numbers = #tpu.dot_dimension_numbers<[1], [0], [0], [1], [0, 0, 1, 1], [], []>} : vector<2x128xbf16>, vector<128x128xbf16>, vector<2x128xf32> -> vector<2x128xf32>
    %72 = vector.extract_strided_slice %1 {offsets = [12, 0], sizes = [1, 128], strides = [1, 1]} : vector<16x128xf32> to vector<1x128xf32>
    %73 = vector.broadcast %72 : vector<1x128xf32> to vector<2x128xf32>
    %74 = arith.addf %71, %73 : vector<2x128xf32>
    %cst_20 = arith.constant 0.000000e+00 : f32
    %75 = vector.broadcast %cst_20 : f32 to vector<2x128xf32>
    %76 = arith.maximumf %74, %75 : vector<2x128xf32>
    %77 = arith.truncf %76 : vector<2x128xf32> to vector<2x128xbf16>
    %c4 = arith.constant 4 : index
    %c0_21 = arith.constant 0 : index
    %c0_22 = arith.constant 0 : index
    %78 = vector.load %arg3[%c4, %c0_21, %c0_22] : memref<5x128x128xbf16, #tpu.memory_space<vmem>>, vector<1x128x128xbf16>
    %79 = vector.shape_cast %78 : vector<1x128x128xbf16> to vector<128x128xbf16>
    %cst_23 = arith.constant dense<0.000000e+00> : vector<2x128xf32>
    %80 = tpu.matmul %77, %79, %cst_23 {dimension_numbers = #tpu.dot_dimension_numbers<[1], [0], [0], [1], [0, 0, 1, 1], [], []>} : vector<2x128xbf16>, vector<128x128xbf16>, vector<2x128xf32> -> vector<2x128xf32>
    %81 = vector.extract_strided_slice %1 {offsets = [13, 0], sizes = [1, 128], strides = [1, 1]} : vector<16x128xf32> to vector<1x128xf32>
    %82 = vector.broadcast %81 : vector<1x128xf32> to vector<2x128xf32>
    %83 = arith.addf %80, %82 : vector<2x128xf32>
    %c0_24 = arith.constant 0 : index
    %c0_25 = arith.constant 0 : index
    %84 = vector.load %arg4[%c0_24, %c0_25] : memref<2x128xf32, #tpu.memory_space<vmem>>, vector<2x128xf32>
    tpu.vector_store %arg4[%c0_24, %c0_25], %83 {strides = array<i32>} : memref<2x128xf32, #tpu.memory_space<vmem>>, vector<2x128xf32>,
    return
  }
  func.func @transform_0(%arg0: i32) -> (i32, i32) {
    %c0_i32 = arith.constant 0 : i32
    %c0_i32_0 = arith.constant 0 : i32
    %c0_i32_1 = arith.constant 0 : i32
    return %c0_i32, %c0_i32_0 : i32, i32
  }
  func.func @transform_1(%arg0: i32) -> (i32, i32) {
    %c0_i32 = arith.constant 0 : i32
    %c0_i32_0 = arith.constant 0 : i32
    %c0_i32_1 = arith.constant 0 : i32
    return %c0_i32, %c0_i32_0 : i32, i32
  }
  func.func @transform_2(%arg0: i32) -> (i32, i32, i32) {
    %c0_i32 = arith.constant 0 : i32
    %c0_i32_0 = arith.constant 0 : i32
    %c0_i32_1 = arith.constant 0 : i32
    %c0_i32_2 = arith.constant 0 : i32
    return %c0_i32, %c0_i32_0, %c0_i32_1 : i32, i32, i32
  }
  func.func @transform_3(%arg0: i32) -> (i32, i32) {
    %c0_i32 = arith.constant 0 : i32
    %c0_i32_0 = arith.constant 0 : i32
    %c0_i32_1 = arith.constant 0 : i32
    return %c0_i32, %c0_i32_0 : i32, i32
  }
}

</mosaic_0001>

<llo_original>
// kernel: tpu_custom_call.1
$region0: #{tpu_custom_call.1}
  #allocation0 [shape = 'u32[]', space=smem, size = 0x4, offset = 0x4, fixed_abs, tag = 'smem constant byte address 0x4 - core index']
  #allocation1 [shape = 'u32[144,128]{1,0:T(1,128)}', space=vmem, size = 0x12000, scoped, tag = 'internal scratch']
  %s0 = inlined_call_operand.vmem [shape: f32[16,8], index: 0, kind: input, shape index: {}]
  %s1 = inlined_call_operand.vmem [shape: f32[16,128], index: 1, kind: input, shape index: {}]
  %s2 = inlined_call_operand.hbm [shape: bf16[5,128,128], index: 2, kind: input, shape index: {}]
  %s3 = inlined_call_operand.hbm [shape: f32[2,128], index: 3, kind: output, shape index: {}]
  %s4 = sld [smem:[#allocation0]]
  $region26: #{tpu_custom_call.1} parent=0
    _
  %s6 = ssub.s32 1, %s4
  %s7 = scalar_select 0, %s6, %s4
  $region1: #{tpu_custom_call.1} parent=0
    #allocation2 [shape = 'u8[163840]{0}', space=vmem, size = 0x28000, scoped, tag = 'input window, operand 2, single buffered']
    #allocation3 [shape = 's32[1]{0}', space=sflag, size = 0x4, scoped, tag = 'scoped memory for tpu_custom_call.1']
    #allocation4 [shape = 's32[1]{0}', space=sflag, size = 0x4, scoped, tag = 'scoped memory for tpu_custom_call.1']
    #allocation5 [shape = 'u8[1024]{0}', space=vmem, size = 0x400, scoped, tag = 'output window, operand 0, single buffered']
    %8 = vsyncpa [#allocation3], 0
    %9 = vsyncpa [#allocation4], 0
    // Predicated region
    $region2: #{tpu_custom_call.1} parent=1 // pred_check
      _
    $region3: #{tpu_custom_call.1} parent=1 // pred_check_branch
      %11 = sbr.rel (0) target = $region5
    $region4: #{tpu_custom_call.1} parent=1 // pred_region
      _
    $region5: #{tpu_custom_call.1} parent=1 // pred_fallthru
      _
    // Predicated region
    $region6: #{tpu_custom_call.1} parent=1 // pred_check
      _
    $region7: #{tpu_custom_call.1} parent=1 // pred_check_branch
      %13 = sbr.rel (0) target = $region9
    $region8: #{tpu_custom_call.1} parent=1 // pred_region
      _
    $region9: #{tpu_custom_call.1} parent=1 // pred_fallthru
      _
    // Predicated region
    $region10: #{tpu_custom_call.1} parent=1 // pred_check
      _
    $region11: #{tpu_custom_call.1} parent=1 // pred_check_branch
      %15 = sbr.rel (0) target = $region13
    $region12: #{tpu_custom_call.1} parent=1 // pred_region
      %s17 = ssub.s32 5120, 5120
      %18 = vsyncadd [#allocation3], %s17
      %s19 = sshll.u32 [#allocation2], 4
      %s20 = int_to_ptr.vmem [resolvable:$true] %s19
      %25 = dma.hbm_to_vmem [thread:$0]  %s2, 5120, %s20, [#allocation3], 64, 64, 4
    $region13: #{tpu_custom_call.1} parent=1 // pred_fallthru
      _
    // Predicated region
    $region14: #{tpu_custom_call.1} parent=1 // pred_check
      _
    $region15: #{tpu_custom_call.1} parent=1 // pred_check_branch
      %27 = sbr.rel (0) target = $region17
    $region16: #{tpu_custom_call.1} parent=1 // pred_region
      %28 = dma.done [#allocation3], 5120
    $region17: #{tpu_custom_call.1} parent=1 // pred_fallthru
      _
    %v30 = vld [vmem:[%s0] sm:$0xff]
    %v31 = vld [vmem:[%s0 + $0x8] sm:$0xff]
    %v32 = vld [vmem:[%s1] sm:$0xff]
    %v33 = vld [vmem:[%s1 + $0x8] sm:$0xff]
    %35 = vset.pattern.permute.xlu0 0
    %36 = vperm.xlu0 %35, %v30
    %v37 = vpop.permute.xlu0 %36
    %40 = vset.pattern.permute.xlu0 0
    %41 = vperm.xlu0 %40, %v31
    %v42 = vpop.permute.xlu0 %41
    %v44 = vlaneseq
    %v45 = vshrl.u32 %v44, 7
    %v46 = vsub.s32 0, %v45
    %v47 = vrot.slane %v32, %v46
    %v48 = vmul.f32 %v37, %v47
    %v49 = vmul.f32 %v42, %v47
    %v50 = vlaneseq
    %v51 = vshrl.u32 %v50, 7
    %v52 = vsub.s32 0, %v51
    %v53 = vrot.slane %v33, %v52
    %v54 = vadd.f32 %v53, %v48
    %v55 = vadd.f32 %v53, %v49
    %56 = vset.pattern.permute.xlu0 1
    %57 = vperm.xlu0 %56, %v30
    %v58 = vpop.permute.xlu0 %57
    %60 = vset.pattern.permute.xlu0 1
    %61 = vperm.xlu0 %60, %v31
    %v62 = vpop.permute.xlu0 %61
    %v64 = vlaneseq
    %v65 = vshrl.u32 %v64, 7
    %v66 = vsub.s32 1, %v65
    %v67 = vrot.slane %v32, %v66
    %v68 = vmul.f32 %v58, %v67
    %v69 = vmul.f32 %v62, %v67
    %v70 = vadd.f32 %v54, %v68
    %v71 = vadd.f32 %v55, %v69
    %72 = vset.pattern.permute.xlu0 2
    %73 = vperm.xlu0 %72, %v30
    %v74 = vpop.permute.xlu0 %73
    %76 = vset.pattern.permute.xlu0 2
    %77 = vperm.xlu0 %76, %v31
    %v78 = vpop.permute.xlu0 %77
    %v80 = vlaneseq
    %v81 = vshrl.u32 %v80, 7
    %v82 = vsub.s32 2, %v81
    %v83 = vrot.slane %v32, %v82
    %v84 = vmul.f32 %v74, %v83
    %v85 = vmul.f32 %v78, %v83
    %v86 = vadd.f32 %v70, %v84
    %v87 = vadd.f32 %v71, %v85
    %88 = vset.pattern.permute.xlu0 3
    %89 = vperm.xlu0 %88, %v30
    %v90 = vpop.permute.xlu0 %89
    %92 = vset.pattern.permute.xlu0 3
    %93 = vperm.xlu0 %92, %v31
    %v94 = vpop.permute.xlu0 %93
    %v96 = vlaneseq
    %v97 = vshrl.u32 %v96, 7
    %v98 = vsub.s32 3, %v97
    %v99 = vrot.slane %v32, %v98
    %v100 = vmul.f32 %v90, %v99
    %v101 = vmul.f32 %v94, %v99
    %v102 = vadd.f32 %v86, %v100
    %v103 = vadd.f32 %v87, %v101
    %104 = vset.pattern.permute.xlu0 4
    %105 = vperm.xlu0 %104, %v30
    %v106 = vpop.permute.xlu0 %105
    %108 = vset.pattern.permute.xlu0 4
    %109 = vperm.xlu0 %108, %v31
    %v110 = vpop.permute.xlu0 %109
    %v112 = vlaneseq
    %v113 = vshrl.u32 %v112, 7
    %v114 = vsub.s32 4, %v113
    %v115 = vrot.slane %v32, %v114
    %v116 = vmul.f32 %v106, %v115
    %v117 = vmul.f32 %v110, %v115
    %v118 = vadd.f32 %v102, %v116
    %v119 = vadd.f32 %v103, %v117
    %v120 = vmax.f32 %v118, 0.0
    %v121 = vmax.f32 %v119, 0.0
    %v122 = vpack.c.bf16 %v121, %v120
    %v123 = vld [vmem:[#allocation2] sm:$0xf]
    %v124 = vld [vmem:[#allocation2 + $0x4] sm:$0xf]
    %v125 = vld [vmem:[#allocation2 + $0x8] sm:$0xf]
    %v126 = vld [vmem:[#allocation2 + $0xc] sm:$0xf]
    %v127 = vld [vmem:[#allocation2 + $0x10] sm:$0xf]
    %v128 = vld [vmem:[#allocation2 + $0x14] sm:$0xf]
    %v129 = vld [vmem:[#allocation2 + $0x18] sm:$0xf]
    %v130 = vld [vmem:[#allocation2 + $0x1c] sm:$0xf]
    %v131 = vld [vmem:[#allocation2 + $0x20] sm:$0xf]
    %v132 = vld [vmem:[#allocation2 + $0x24] sm:$0xf]
    %v133 = vld [vmem:[#allocation2 + $0x28] sm:$0xf]
    %v134 = vld [vmem:[#allocation2 + $0x2c] sm:$0xf]
    %v135 = vld [vmem:[#allocation2 + $0x30] sm:$0xf]
    %v136 = vld [vmem:[#allocation2 + $0x34] sm:$0xf]
    %v137 = vld [vmem:[#allocation2 + $0x38] sm:$0xf]
    %v138 = vld [vmem:[#allocation2 + $0x3c] sm:$0xf]
    %v139 = vlaneseq
    %v140 = vshrl.u32 %v139, 7
    %v141 = vsub.s32 1, %v140
    %v142 = vrot.slane %v33, %v141
    %v159 = vunpack.c.l.b16 %v123
    %v160 = vunpack.c.l.b16 %v124
    %v161 = vunpack.c.l.b16 %v125
    %v162 = vunpack.c.l.b16 %v126
    %v163 = vunpack.c.l.b16 %v127
    %v164 = vunpack.c.l.b16 %v128
    %v165 = vunpack.c.l.b16 %v129
    %v166 = vunpack.c.l.b16 %v130
    %v167 = vunpack.c.l.b16 %v131
    %v168 = vunpack.c.l.b16 %v132
    %v169 = vunpack.c.l.b16 %v133
    %v170 = vunpack.c.l.b16 %v134
    %v171 = vunpack.c.l.b16 %v135
    %v172 = vunpack.c.l.b16 %v136
    %v173 = vunpack.c.l.b16 %v137
    %v174 = vunpack.c.l.b16 %v138
    %v175 = vpack.c.b16 %v160, %v159
    %v176 = vpack.c.b16 %v162, %v161
    %v177 = vpack.c.b16 %v164, %v163
    %v178 = vpack.c.b16 %v166, %v165
    %v179 = vpack.c.b16 %v168, %v167
    %v180 = vpack.c.b16 %v170, %v169
    %v181 = vpack.c.b16 %v172, %v171
    %v182 = vpack.c.b16 %v174, %v173
    %191 = vmatprep.subr.bf16.mxu0 0
    %192 = vmatpush1.bf16.msra.mxu0 %v182
    %193 = vmatprep.subr.bf16.mxu0 0
    %194 = vmatpush1.bf16.msra.mxu0 %v181
    %195 = vmatprep.subr.bf16.mxu0 0
    %196 = vmatpush1.bf16.msra.mxu0 %v180
    %197 = vmatprep.subr.bf16.mxu0 0
    %198 = vmatpush1.bf16.msra.mxu0 %v179
    %199 = vmatprep.subr.bf16.mxu0 0
    %200 = vmatpush1.bf16.msra.mxu0 %v178
    %201 = vmatprep.subr.bf16.mxu0 0
    %202 = vmatpush1.bf16.msra.mxu0 %v177
    %203 = vmatprep.subr.bf16.mxu0 0
    %204 = vmatpush1.bf16.msra.mxu0 %v176
    %205 = vmatprep.subr.bf16.mxu0 0
    %206 = vmatpush1.bf16.msra.mxu0 %v175
    %207 = vmatprep.subr.bf16.mxu0 0
    %208 = vmatpush2.bf16.msra.mxu0 0
    %209 = vmatprep.subr.bf16.mxu0 0
    %210 = vmatpush2.bf16.msra.mxu0 0
    %211 = vmatprep.subr.bf16.mxu0 0
    %212 = vmatpush2.bf16.msra.mxu0 0
    %213 = vmatprep.subr.bf16.mxu0 0
    %214 = vmatpush2.bf16.msra.mxu0 0
    %215 = vmatprep.subr.bf16.mxu0 0
    %216 = vmatpush2.bf16.msra.mxu0 0
    %217 = vmatprep.subr.bf16.mxu0 0
    %218 = vmatpush2.bf16.msra.mxu0 0
    %219 = vmatprep.subr.bf16.mxu0 0
    %220 = vmatpush2.bf16.msra.mxu0 0
    %221 = vmatprep.subr.bf16.mxu0 0
    %222 = vmatpush2.bf16.msra.mxu0 0
    %223 = vmatprep.mubr.bf16.mxu0 0
    %224 = vmatmul.mubr.bf16.gmra.mxu0 %v122
    %v225 = vpop.f32.mrf.mxu0
    %v226 = vadd.f32 %v142, %v225
    %v227 = vpop.f32.mrf.mxu0
    %v228 = vpop.f32.mrf.mxu0
    %v229 = vadd.f32 %v142, %v228
    %v230 = vpop.f32.mrf.mxu0
    %231 = vdwg.mxu0
    %v232 = vmax.f32 %v226, 0.0
    %v233 = vmax.f32 %v229, 0.0
    %v234 = vpack.c.bf16 %v233, %v232
    %s235 = scalar_lea.vmem [#allocation2], 64
    %v236 = vld [vmem:[%s235] sm:$0xf]
    %v237 = vld [vmem:[%s235 + $0x4] sm:$0xf]
    %v238 = vld [vmem:[%s235 + $0x8] sm:$0xf]
    %v239 = vld [vmem:[%s235 + $0xc] sm:$0xf]
    %v240 = vld [vmem:[%s235 + $0x10] sm:$0xf]
    %v241 = vld [vmem:[%s235 + $0x14] sm:$0xf]
    %v242 = vld [vmem:[%s235 + $0x18] sm:$0xf]
    %v243 = vld [vmem:[%s235 + $0x1c] sm:$0xf]
    %v244 = vld [vmem:[%s235 + $0x20] sm:$0xf]
    %v245 = vld [vmem:[%s235 + $0x24] sm:$0xf]
    %v246 = vld [vmem:[%s235 + $0x28] sm:$0xf]
    %v247 = vld [vmem:[%s235 + $0x2c] sm:$0xf]
    %v248 = vld [vmem:[%s235 + $0x30] sm:$0xf]
    %v249 = vld [vmem:[%s235 + $0x34] sm:$0xf]
    %v250 = vld [vmem:[%s235 + $0x38] sm:$0xf]
    %v251 = vld [vmem:[%s235 + $0x3c] sm:$0xf]
    %v252 = vlaneseq
    %v253 = vshrl.u32 %v252, 7
    %v254 = vsub.s32 2, %v253
    %v255 = vrot.slane %v33, %v254
    %v272 = vunpack.c.l.b16 %v236
    %v273 = vunpack.c.l.b16 %v237
    %v274 = vunpack.c.l.b16 %v238
    %v275 = vunpack.c.l.b16 %v239
    %v276 = vunpack.c.l.b16 %v240
    %v277 = vunpack.c.l.b16 %v241
    %v278 = vunpack.c.l.b16 %v242
    %v279 = vunpack.c.l.b16 %v243
    %v280 = vunpack.c.l.b16 %v244
    %v281 = vunpack.c.l.b16 %v245
    %v282 = vunpack.c.l.b16 %v246
    %v283 = vunpack.c.l.b16 %v247
    %v284 = vunpack.c.l.b16 %v248
    %v285 = vunpack.c.l.b16 %v249
    %v286 = vunpack.c.l.b16 %v250
    %v287 = vunpack.c.l.b16 %v251
    %v288 = vpack.c.b16 %v273, %v272
    %v289 = vpack.c.b16 %v275, %v274
    %v290 = vpack.c.b16 %v277, %v276
    %v291 = vpack.c.b16 %v279, %v278
    %v292 = vpack.c.b16 %v281, %v280
    %v293 = vpack.c.b16 %v283, %v282
    %v294 = vpack.c.b16 %v285, %v284
    %v295 = vpack.c.b16 %v287, %v286
    %304 = vmatprep.subr.bf16.mxu0 0
    %305 = vmatpush1.bf16.msra.mxu0 %v295
    %306 = vmatprep.subr.bf16.mxu0 0
    %307 = vmatpush1.bf16.msra.mxu0 %v294
    %308 = vmatprep.subr.bf16.mxu0 0
    %309 = vmatpush1.bf16.msra.mxu0 %v293
    %310 = vmatprep.subr.bf16.mxu0 0
    %311 = vmatpush1.bf16.msra.mxu0 %v292
    %312 = vmatprep.subr.bf16.mxu0 0
    %313 = vmatpush1.bf16.msra.mxu0 %v291
    %314 = vmatprep.subr.bf16.mxu0 0
    %315 = vmatpush1.bf16.msra.mxu0 %v290
    %316 = vmatprep.subr.bf16.mxu0 0
    %317 = vmatpush1.bf16.msra.mxu0 %v289
    %318 = vmatprep.subr.bf16.mxu0 0
    %319 = vmatpush1.bf16.msra.mxu0 %v288
    %320 = vmatprep.subr.bf16.mxu0 0
    %321 = vmatpush2.bf16.msra.mxu0 0
    %322 = vmatprep.subr.bf16.mxu0 0
    %323 = vmatpush2.bf16.msra.mxu0 0
    %324 = vmatprep.subr.bf16.mxu0 0
    %325 = vmatpush2.bf16.msra.mxu0 0
    %326 = vmatprep.subr.bf16.mxu0 0
    %327 = vmatpush2.bf16.msra.mxu0 0
    %328 = vmatprep.subr.bf16.mxu0 0
    %329 = vmatpush2.bf16.msra.mxu0 0
    %330 = vmatprep.subr.bf16.mxu0 0
    %331 = vmatpush2.bf16.msra.mxu0 0
    %332 = vmatprep.subr.bf16.mxu0 0
    %333 = vmatpush2.bf16.msra.mxu0 0
    %334 = vmatprep.subr.bf16.mxu0 0
    %335 = vmatpush2.bf16.msra.mxu0 0
    %336 = vmatprep.mubr.bf16.mxu0 0
    %337 = vmatmul.mubr.bf16.gmra.mxu0 %v234
    %v338 = vpop.f32.mrf.mxu0
    %v339 = vadd.f32 %v255, %v338
    %v340 = vpop.f32.mrf.mxu0
    %v341 = vpop.f32.mrf.mxu0
    %v342 = vadd.f32 %v255, %v341
    %v343 = vpop.f32.mrf.mxu0
    %344 = vdwg.mxu0
    %v345 = vmax.f32 %v339, 0.0
    %v346 = vmax.f32 %v342, 0.0
    %v347 = vpack.c.bf16 %v346, %v345
    %s348 = scalar_lea.vmem [#allocation2], 128
    %v349 = vld [vmem:[%s348] sm:$0xf]
    %v350 = vld [vmem:[%s348 + $0x4] sm:$0xf]
    %v351 = vld [vmem:[%s348 + $0x8] sm:$0xf]
    %v352 = vld [vmem:[%s348 + $0xc] sm:$0xf]
    %v353 = vld [vmem:[%s348 + $0x10] sm:$0xf]
    %v354 = vld [vmem:[%s348 + $0x14] sm:$0xf]
    %v355 = vld [vmem:[%s348 + $0x18] sm:$0xf]
    %v356 = vld [vmem:[%s348 + $0x1c] sm:$0xf]
    %v357 = vld [vmem:[%s348 + $0x20] sm:$0xf]
    %v358 = vld [vmem:[%s348 + $0x24] sm:$0xf]
    %v359 = vld [vmem:[%s348 + $0x28] sm:$0xf]
    %v360 = vld [vmem:[%s348 + $0x2c] sm:$0xf]
    %v361 = vld [vmem:[%s348 + $0x30] sm:$0xf]
    %v362 = vld [vmem:[%s348 + $0x34] sm:$0xf]
    %v363 = vld [vmem:[%s348 + $0x38] sm:$0xf]
    %v364 = vld [vmem:[%s348 + $0x3c] sm:$0xf]
    %v365 = vlaneseq
    %v366 = vshrl.u32 %v365, 7
    %v367 = vsub.s32 3, %v366
    %v368 = vrot.slane %v33, %v367
    %v385 = vunpack.c.l.b16 %v349
    %v386 = vunpack.c.l.b16 %v350
    %v387 = vunpack.c.l.b16 %v351
    %v388 = vunpack.c.l.b16 %v352
    %v389 = vunpack.c.l.b16 %v353
    %v390 = vunpack.c.l.b16 %v354
    %v391 = vunpack.c.l.b16 %v355
    %v392 = vunpack.c.l.b16 %v356
    %v393 = vunpack.c.l.b16 %v357
    %v394 = vunpack.c.l.b16 %v358
    %v395 = vunpack.c.l.b16 %v359
    %v396 = vunpack.c.l.b16 %v360
    %v397 = vunpack.c.l.b16 %v361
    %v398 = vunpack.c.l.b16 %v362
    %v399 = vunpack.c.l.b16 %v363
    %v400 = vunpack.c.l.b16 %v364
    %v401 = vpack.c.b16 %v386, %v385
    %v402 = vpack.c.b16 %v388, %v387
    %v403 = vpack.c.b16 %v390, %v389
    %v404 = vpack.c.b16 %v392, %v391
    %v405 = vpack.c.b16 %v394, %v393
    %v406 = vpack.c.b16 %v396, %v395
    %v407 = vpack.c.b16 %v398, %v397
    %v408 = vpack.c.b16 %v400, %v399
    %417 = vmatprep.subr.bf16.mxu0 0
    %418 = vmatpush1.bf16.msra.mxu0 %v408
    %419 = vmatprep.subr.bf16.mxu0 0
    %420 = vmatpush1.bf16.msra.mxu0 %v407
    %421 = vmatprep.subr.bf16.mxu0 0
    %422 = vmatpush1.bf16.msra.mxu0 %v406
    %423 = vmatprep.subr.bf16.mxu0 0
    %424 = vmatpush1.bf16.msra.mxu0 %v405
    %425 = vmatprep.subr.bf16.mxu0 0
    %426 = vmatpush1.bf16.msra.mxu0 %v404
    %427 = vmatprep.subr.bf16.mxu0 0
    %428 = vmatpush1.bf16.msra.mxu0 %v403
    %429 = vmatprep.subr.bf16.mxu0 0
    %430 = vmatpush1.bf16.msra.mxu0 %v402
    %431 = vmatprep.subr.bf16.mxu0 0
    %432 = vmatpush1.bf16.msra.mxu0 %v401
    %433 = vmatprep.subr.bf16.mxu0 0
    %434 = vmatpush2.bf16.msra.mxu0 0
    %435 = vmatprep.subr.bf16.mxu0 0
    %436 = vmatpush2.bf16.msra.mxu0 0
    %437 = vmatprep.subr.bf16.mxu0 0
    %438 = vmatpush2.bf16.msra.mxu0 0
    %439 = vmatprep.subr.bf16.mxu0 0
    %440 = vmatpush2.bf16.msra.mxu0 0
    %441 = vmatprep.subr.bf16.mxu0 0
    %442 = vmatpush2.bf16.msra.mxu0 0
    %443 = vmatprep.subr.bf16.mxu0 0
    %444 = vmatpush2.bf16.msra.mxu0 0
    %445 = vmatprep.subr.bf16.mxu0 0
    %446 = vmatpush2.bf16.msra.mxu0 0
    %447 = vmatprep.subr.bf16.mxu0 0
    %448 = vmatpush2.bf16.msra.mxu0 0
    %449 = vmatprep.mubr.bf16.mxu0 0
    %450 = vmatmul.mubr.bf16.gmra.mxu0 %v347
    %v451 = vpop.f32.mrf.mxu0
    %v452 = vadd.f32 %v368, %v451
    %v453 = vpop.f32.mrf.mxu0
    %v454 = vpop.f32.mrf.mxu0
    %v455 = vadd.f32 %v368, %v454
    %v456 = vpop.f32.mrf.mxu0
    %457 = vdwg.mxu0
    %v458 = vmul.f32 %v30, 0.125
    %v459 = vmul.f32 %v31, 0.125
    %461 = vset.pattern.permute.xlu0 4
    %462 = vperm.xlu0 %461, %v458
    %v463 = vpop.permute.xlu0 %462
    %466 = vset.pattern.permute.xlu0 4
    %467 = vperm.xlu0 %466, %v459
    %v468 = vpop.permute.xlu0 %467
    %v470 = vmul.f32 %v452, %v463
    %v471 = vmul.f32 %v455, %v468
    %v472 = vrot.slane %v470, 4
    %v473 = vadd.f32 %v470, %v472
    %v474 = vrot.slane %v473, 2
    %v475 = vadd.f32 %v473, %v474
    %v476 = vrot.slane %v475, 1
    %v477 = vadd.f32 %v475, %v476
    %v478 = vrot.slane %v471, 4
    %v479 = vadd.f32 %v471, %v478
    %v480 = vrot.slane %v479, 2
    %v481 = vadd.f32 %v479, %v480
    %v482 = vrot.slane %v481, 1
    %v483 = vadd.f32 %v481, %v482
    %v484 = vpack.c.bf16 %v477, %v477
    %v485 = vpack.c.bf16 %v483, %v483
    %s486 = scalar_lea.vmem [#allocation2], 192
    %v487 = vld [vmem:[%s486] sm:$0xf]
    %v488 = vld [vmem:[%s486 + $0x4] sm:$0xf]
    %v489 = vld [vmem:[%s486 + $0x8] sm:$0xf]
    %v490 = vld [vmem:[%s486 + $0xc] sm:$0xf]
    %v491 = vld [vmem:[%s486 + $0x10] sm:$0xf]
    %v492 = vld [vmem:[%s486 + $0x14] sm:$0xf]
    %v493 = vld [vmem:[%s486 + $0x18] sm:$0xf]
    %v494 = vld [vmem:[%s486 + $0x1c] sm:$0xf]
    %v495 = vld [vmem:[%s486 + $0x20] sm:$0xf]
    %v496 = vld [vmem:[%s486 + $0x24] sm:$0xf]
    %v497 = vld [vmem:[%s486 + $0x28] sm:$0xf]
    %v498 = vld [vmem:[%s486 + $0x2c] sm:$0xf]
    %v499 = vld [vmem:[%s486 + $0x30] sm:$0xf]
    %v500 = vld [vmem:[%s486 + $0x34] sm:$0xf]
    %v501 = vld [vmem:[%s486 + $0x38] sm:$0xf]
    %v502 = vld [vmem:[%s486 + $0x3c] sm:$0xf]
    %v503 = vlaneseq
    %v504 = vshrl.u32 %v503, 7
    %v505 = vsub.s32 4, %v504
    %v506 = vrot.slane %v33, %v505
    %v509 = vunpack.c.l.b16 %v484
    %v510 = vunpack.c.l.b16 %v485
    %vm511 = vcmask 1041409
    %v512 = vsel %vm511, %v510, %v509
    %v513 = vpack.c.b16 %v512, %v512
    %v531 = vunpack.c.l.b16 %v487
    %v532 = vunpack.c.l.b16 %v488
    %v533 = vunpack.c.l.b16 %v489
    %v534 = vunpack.c.l.b16 %v490
    %v535 = vunpack.c.l.b16 %v491
    %v536 = vunpack.c.l.b16 %v492
    %v537 = vunpack.c.l.b16 %v493
    %v538 = vunpack.c.l.b16 %v494
    %v539 = vunpack.c.l.b16 %v495
    %v540 = vunpack.c.l.b16 %v496
    %v541 = vunpack.c.l.b16 %v497
    %v542 = vunpack.c.l.b16 %v498
    %v543 = vunpack.c.l.b16 %v499
    %v544 = vunpack.c.l.b16 %v500
    %v545 = vunpack.c.l.b16 %v501
    %v546 = vunpack.c.l.b16 %v502
    %v547 = vpack.c.b16 %v532, %v531
    %v548 = vpack.c.b16 %v534, %v533
    %v549 = vpack.c.b16 %v536, %v535
    %v550 = vpack.c.b16 %v538, %v537
    %v551 = vpack.c.b16 %v540, %v539
    %v552 = vpack.c.b16 %v542, %v541
    %v553 = vpack.c.b16 %v544, %v543
    %v554 = vpack.c.b16 %v546, %v545
    %563 = vmatprep.subr.bf16.mxu0 0
    %564 = vmatpush1.bf16.msra.mxu0 %v554
    %565 = vmatprep.subr.bf16.mxu0 0
    %566 = vmatpush1.bf16.msra.mxu0 %v553
    %567 = vmatprep.subr.bf16.mxu0 0
    %568 = vmatpush1.bf16.msra.mxu0 %v552
    %569 = vmatprep.subr.bf16.mxu0 0
    %570 = vmatpush1.bf16.msra.mxu0 %v551
    %571 = vmatprep.subr.bf16.mxu0 0
    %572 = vmatpush1.bf16.msra.mxu0 %v550
    %573 = vmatprep.subr.bf16.mxu0 0
    %574 = vmatpush1.bf16.msra.mxu0 %v549
    %575 = vmatprep.subr.bf16.mxu0 0
    %576 = vmatpush1.bf16.msra.mxu0 %v548
    %577 = vmatprep.subr.bf16.mxu0 0
    %578 = vmatpush1.bf16.msra.mxu0 %v547
    %579 = vmatprep.subr.bf16.mxu0 0
    %580 = vmatpush2.bf16.msra.mxu0 0
    %581 = vmatprep.subr.bf16.mxu0 0
    %582 = vmatpush2.bf16.msra.mxu0 0
    %583 = vmatprep.subr.bf16.mxu0 0
    %584 = vmatpush2.bf16.msra.mxu0 0
    %585 = vmatprep.subr.bf16.mxu0 0
    %586 = vmatpush2.bf16.msra.mxu0 0
    %587 = vmatprep.subr.bf16.mxu0 0
    %588 = vmatpush2.bf16.msra.mxu0 0
    %589 = vmatprep.subr.bf16.mxu0 0
    %590 = vmatpush2.bf16.msra.mxu0 0
    %591 = vmatprep.subr.bf16.mxu0 0
    %592 = vmatpush2.bf16.msra.mxu0 0
    %593 = vmatprep.subr.bf16.mxu0 0
    %594 = vmatpush2.bf16.msra.mxu0 0
    %595 = vmatprep.mubr.bf16.mxu0 0
    %596 = vmatmul.mubr.bf16.gmra.mxu0 %v513
    %v597 = vpop.f32.mrf.mxu0
    %v598 = vadd.f32 %v506, %v597
    %v599 = vpop.f32.mrf.mxu0
    %v600 = vpop.f32.mrf.mxu0
    %v601 = vpop.f32.mrf.mxu0
    %602 = vdwg.mxu0
    %v603 = vmax.f32 %v598, 0.0
    %v604 = vpack.c.bf16 %v603, %v603
    %s605 = scalar_lea.vmem [#allocation2], 256
    %v606 = vld [vmem:[%s605] sm:$0xf]
    %v607 = vld [vmem:[%s605 + $0x4] sm:$0xf]
    %v608 = vld [vmem:[%s605 + $0x8] sm:$0xf]
    %v609 = vld [vmem:[%s605 + $0xc] sm:$0xf]
    %v610 = vld [vmem:[%s605 + $0x10] sm:$0xf]
    %v611 = vld [vmem:[%s605 + $0x14] sm:$0xf]
    %v612 = vld [vmem:[%s605 + $0x18] sm:$0xf]
    %v613 = vld [vmem:[%s605 + $0x1c] sm:$0xf]
    %v614 = vld [vmem:[%s605 + $0x20] sm:$0xf]
    %v615 = vld [vmem:[%s605 + $0x24] sm:$0xf]
    %v616 = vld [vmem:[%s605 + $0x28] sm:$0xf]
    %v617 = vld [vmem:[%s605 + $0x2c] sm:$0xf]
    %v618 = vld [vmem:[%s605 + $0x30] sm:$0xf]
    %v619 = vld [vmem:[%s605 + $0x34] sm:$0xf]
    %v620 = vld [vmem:[%s605 + $0x38] sm:$0xf]
    %v621 = vld [vmem:[%s605 + $0x3c] sm:$0xf]
    %v622 = vlaneseq
    %v623 = vshrl.u32 %v622, 7
    %v624 = vsub.s32 5, %v623
    %v625 = vrot.slane %v33, %v624
    %v642 = vunpack.c.l.b16 %v606
    %v643 = vunpack.c.l.b16 %v607
    %v644 = vunpack.c.l.b16 %v608
    %v645 = vunpack.c.l.b16 %v609
    %v646 = vunpack.c.l.b16 %v610
    %v647 = vunpack.c.l.b16 %v611
    %v648 = vunpack.c.l.b16 %v612
    %v649 = vunpack.c.l.b16 %v613
    %v650 = vunpack.c.l.b16 %v614
    %v651 = vunpack.c.l.b16 %v615
    %v652 = vunpack.c.l.b16 %v616
    %v653 = vunpack.c.l.b16 %v617
    %v654 = vunpack.c.l.b16 %v618
    %v655 = vunpack.c.l.b16 %v619
    %v656 = vunpack.c.l.b16 %v620
    %v657 = vunpack.c.l.b16 %v621
    %v658 = vpack.c.b16 %v643, %v642
    %v659 = vpack.c.b16 %v645, %v644
    %v660 = vpack.c.b16 %v647, %v646
    %v661 = vpack.c.b16 %v649, %v648
    %v662 = vpack.c.b16 %v651, %v650
    %v663 = vpack.c.b16 %v653, %v652
    %v664 = vpack.c.b16 %v655, %v654
    %v665 = vpack.c.b16 %v657, %v656
    %674 = vmatprep.subr.bf16.mxu0 0
    %675 = vmatpush1.bf16.msra.mxu0 %v665
    %676 = vmatprep.subr.bf16.mxu0 0
    %677 = vmatpush1.bf16.msra.mxu0 %v664
    %678 = vmatprep.subr.bf16.mxu0 0
    %679 = vmatpush1.bf16.msra.mxu0 %v663
    %680 = vmatprep.subr.bf16.mxu0 0
    %681 = vmatpush1.bf16.msra.mxu0 %v662
    %682 = vmatprep.subr.bf16.mxu0 0
    %683 = vmatpush1.bf16.msra.mxu0 %v661
    %684 = vmatprep.subr.bf16.mxu0 0
    %685 = vmatpush1.bf16.msra.mxu0 %v660
    %686 = vmatprep.subr.bf16.mxu0 0
    %687 = vmatpush1.bf16.msra.mxu0 %v659
    %688 = vmatprep.subr.bf16.mxu0 0
    %689 = vmatpush1.bf16.msra.mxu0 %v658
    %690 = vmatprep.subr.bf16.mxu0 0
    %691 = vmatpush2.bf16.msra.mxu0 0
    %692 = vmatprep.subr.bf16.mxu0 0
    %693 = vmatpush2.bf16.msra.mxu0 0
    %694 = vmatprep.subr.bf16.mxu0 0
    %695 = vmatpush2.bf16.msra.mxu0 0
    %696 = vmatprep.subr.bf16.mxu0 0
    %697 = vmatpush2.bf16.msra.mxu0 0
    %698 = vmatprep.subr.bf16.mxu0 0
    %699 = vmatpush2.bf16.msra.mxu0 0
    %700 = vmatprep.subr.bf16.mxu0 0
    %701 = vmatpush2.bf16.msra.mxu0 0
    %702 = vmatprep.subr.bf16.mxu0 0
    %703 = vmatpush2.bf16.msra.mxu0 0
    %704 = vmatprep.subr.bf16.mxu0 0
    %705 = vmatpush2.bf16.msra.mxu0 0
    %706 = vmatprep.mubr.bf16.mxu0 0
    %707 = vmatmul.mubr.bf16.gmra.mxu0 %v604
    %v708 = vpop.f32.mrf.mxu0
    %v709 = vadd.f32 %v625, %v708
    %v710 = vpop.f32.mrf.mxu0
    %v711 = vpop.f32.mrf.mxu0
    %v712 = vpop.f32.mrf.mxu0
    %713 = vdwg.mxu0
    %714 = vst [vmem:[#allocation5] sm:$0x3] %v709
    // Predicated region
    $region18: #{tpu_custom_call.1} parent=1 // pred_check
      _
    $region19: #{tpu_custom_call.1} parent=1 // pred_check_branch
      %716 = sbr.rel (0) target = $region21
    $region20: #{tpu_custom_call.1} parent=1 // pred_region
      %s718 = ssub.s32 32, 32
      %719 = vsyncadd [#allocation4], %s718
      %s721 = sshll.u32 [#allocation5], 4
      %s722 = int_to_ptr.vmem [resolvable:$true] %s721
      %724 = dma.vmem_to_hbm [thread:$0]  %s722, 32, %s3, [#allocation4]
    $region21: #{tpu_custom_call.1} parent=1 // pred_fallthru
      _
    // Predicated region
    $region22: #{tpu_custom_call.1} parent=1 // pred_check
      _
    $region23: #{tpu_custom_call.1} parent=1 // pred_check_branch
      %726 = sbr.rel (0) target = $region25
    $region24: #{tpu_custom_call.1} parent=1 // pred_region
      %727 = dma.done [#allocation4], 32
    $region25: #{tpu_custom_call.1} parent=1 // pred_fallthru
      _
    %728 = vsyncpa [#allocation3], 1
    %729 = vsyncpa [#allocation4], 1

</llo_original>
